<compile_context>
chip_gen: v7x
topology: tpu7x:2x2x1
jax: 0.10.0
libtpu: 0.0.40
codegen_flags: <defaults>
</compile_context>

<pallas_src>
import jax
import jax.numpy as jnp
from jax.experimental import pallas as pl
from jax.experimental.pallas import tpu as pltpu


def duc_matmul_bias_relu_kernel(p_ref, w_ref, b_ref, o_ref):
    """Fused [3x3 conv as im2col matmul + folded BatchNorm(eval) + ReLU], one tile.

    p_ref: (1, K, tile_n)    bf16 im2col patches (K = 9*Cin), lane-dense in n
    w_ref: (Cout, K)         bf16 conv weights with BN scale pre-folded
    b_ref: (Cout, 1)         f32  folded bias ((conv_b - mean)*scale + beta)
    o_ref: (1, Cout, tile_n) f32  conv output tile in NC(HW) layout, lane-dense
    """
    # Single MXU matmul, f32 accumulation.
    acc = jnp.dot(w_ref[...], p_ref[0], preferred_element_type=jnp.float32)
    y = acc + b_ref[...]                                  # lane-broadcast bias (VPU, f32)
    o_ref[0] = jnp.maximum(y, 0.0).astype(o_ref.dtype)    # ReLU, unmasked lane-dense store


def pad_and_concat(x1, x2):
    """Replicates the PyTorch forward's F.pad + torch.cat (NCHW).

    NOTE: the original module swaps diffX/diffY naming (the H-difference pads W
    and vice versa); replicated faithfully.  Symmetric here since both diffs
    are equal in the test.
    """
    diffX = x1.shape[2] - x2.shape[2]
    diffY = x1.shape[3] - x2.shape[3]
    # torch pad tuple order: (W_left, W_right, H_top, H_bottom)
    x2p = jnp.pad(
        x2,
        ((0, 0), (0, 0),
         (diffY // 2, int(diffY / 2)),
         (diffX // 2, int(diffX / 2))),
    )
    return jnp.concatenate([x2p, x1], axis=1)


def _pick_tile_n(n, cap=2048):
    """Largest multiple of 128 that divides n (capped); else the full dim.

    cap=2048 keeps double-buffered tiles far under VMEM even on v7x (64 MiB).
    """
    if n % 128 != 0 or n <= 128:
        return n
    t = min(cap, n)
    t -= t % 128
    while n % t != 0:
        t -= 128
    return t


def duc_block_forward(x1, x2, w_oihw, conv_b, gamma, beta, run_mean, run_var,
                      upfactor, eps=1e-5, mxu_dtype=jnp.bfloat16):
    """x1, x2: NCHW float32. Returns NCHW (B, outplanes, H*L, W*L)."""
    x = pad_and_concat(x1, x2)                        # (B, Cin, H, W)  NCHW
    B, Cin, H, W = x.shape
    Cout = w_oihw.shape[0]
    L = upfactor
    C = Cout // (L * L)
    K = 9 * Cin
    N = H * W

    # --- im2col, built straight from NCHW (no layout transposes) ------------
    x_pad = jnp.pad(x, ((0, 0), (0, 0), (1, 1), (1, 1)))          # conv halo
    patches = jnp.stack(
        [x_pad[:, :, dh:dh + H, dw:dw + W] for dh in range(3) for dw in range(3)],
        axis=2)                                        # (B, Cin, 9, H, W)
    patches = patches.reshape(B, K, N).astype(mxu_dtype)   # K order = (cin, kh, kw)

    # --- fold conv bias + eval-mode BatchNorm into weights / bias -----------
    scale = gamma / jnp.sqrt(run_var + eps)                         # (Cout,)
    w2d = (w_oihw * scale[:, None, None, None]).reshape(Cout, K).astype(mxu_dtype)
    bias = ((conv_b - run_mean) * scale + beta).reshape(Cout, 1).astype(jnp.float32)

    tile_n = _pick_tile_n(N)
    grid = (B, N // tile_n)

    conv_out = pl.pallas_call(
        duc_matmul_bias_relu_kernel,
        out_shape=jax.ShapeDtypeStruct((B, Cout, N), jnp.float32),
        grid=grid,
        in_specs=[
            pl.BlockSpec((1, K, tile_n), lambda b, n: (b, 0, n)),   # patches tile
            pl.BlockSpec((Cout, K), lambda b, n: (0, 0)),           # weights (whole)
            pl.BlockSpec((Cout, 1), lambda b, n: (0, 0)),           # bias   (whole)
        ],
        out_specs=pl.BlockSpec((1, Cout, tile_n), lambda b, n: (b, 0, n)),
        compiler_params=pltpu.CompilerParams(
            dimension_semantics=("parallel", "parallel")),
    )(patches, w2d, bias)

    # --- PixelShuffle(L): (B, C*L*L, H, W) -> (B, C, H*L, W*L) ---------------
    # TODO(synk): could be folded into the output index_map for h-contiguous
    # tiles; kept as XLA glue since producing the module's NCHW output forces
    # one (small) relayout of the result anyway.
    y = conv_out.reshape(B, C, L, L, H, W)
    y = jnp.transpose(y, (0, 1, 4, 2, 5, 3)).reshape(B, C, H * L, W * L)
    return y


def reference_forward(x1, x2, w_oihw, conv_b, gamma, beta, run_mean, run_var,
                      upfactor, eps=1e-5):
    """Pure-JAX f32 reference (same eval-mode BN semantics) for verification."""
    x = pad_and_concat(x1, x2)
    y = jax.lax.conv_general_dilated(
        x, w_oihw, window_strides=(1, 1), padding=((1, 1), (1, 1)),
        dimension_numbers=('NCHW', 'OIHW', 'NCHW'),
        precision=jax.lax.Precision.HIGHEST)
    y = y + conv_b[None, :, None, None]
    y = (y - run_mean[None, :, None, None]) / jnp.sqrt(run_var + eps)[None, :, None, None]
    y = y * gamma[None, :, None, None] + beta[None, :, None, None]
    y = jnp.maximum(y, 0.0)
    B, CLL, H, W = y.shape
    L = upfactor
    C = CLL // (L * L)
    y = y.reshape(B, C, L, L, H, W)
    y = jnp.transpose(y, (0, 1, 4, 2, 5, 3)).reshape(B, C, H * L, W * L)
    return y


if __name__ == "__main__":
    key = jax.random.PRNGKey(0)
    k1, k2, kw, kb, kg, kbe, km, kv = jax.random.split(key, 8)

    # Module config: DenseUpsamplingConvBlock(upfactor=2, inplanes=8, outplanes=4)
    upfactor, outplanes = 2, 4
    C1, C2 = 4, 4
    inplanes = C1 + C2
    up_planes = upfactor ** 2 * outplanes             # 16

    # Inputs (NCHW): x2 is 2px smaller spatially -> exercises the pad path.
    x1 = jax.random.normal(k1, (2, C1, 16, 16), jnp.float32)
    x2 = jax.random.normal(k2, (2, C2, 14, 14), jnp.float32)

    # Deterministic synthetic parameters (shapes from the module __init__).
    w_oihw = jax.random.normal(kw, (up_planes, inplanes, 3, 3), jnp.float32) * 0.1
    conv_b = jax.random.normal(kb, (up_planes,), jnp.float32) * 0.1
    gamma = 1.0 + 0.1 * jax.random.normal(kg, (up_planes,), jnp.float32)
    beta = 0.1 * jax.random.normal(kbe, (up_planes,), jnp.float32)
    run_mean = 0.1 * jax.random.normal(km, (up_planes,), jnp.float32)
    run_var = jax.random.uniform(kv, (up_planes,), jnp.float32, minval=0.5, maxval=1.5)

    out = duc_block_forward(x1, x2, w_oihw, conv_b, gamma, beta,
                            run_mean, run_var, upfactor)
    out = jax.block_until_ready(out)

    ref = reference_forward(x1, x2, w_oihw, conv_b, gamma, beta,
                            run_mean, run_var, upfactor)
    ref = jax.block_until_ready(ref)

    assert out.shape == (2, outplanes, 32, 32), out.shape
    # Tolerance relaxed vs a pure-f32 path: the kernel feeds bf16 operands to
    # the MXU (per perf review for v6e/v7x) while accumulating in f32.
    assert jnp.allclose(out, ref, atol=2e-2, rtol=2e-2), \
        float(jnp.max(jnp.abs(out - ref)))

    print("KERNEL_OK")
</pallas_src>

<mosaic_0001>
module attributes {stable_mosaic.version = 11 : i64} {
  func.func @duc_matmul_bias_relu_kernel(%arg0: i32, %arg1: i32, %arg2: memref<1x72x256xbf16, #tpu.memory_space<vmem>>, %arg3: memref<16x72xbf16, #tpu.memory_space<vmem>>, %arg4: memref<16x1xf32, #tpu.memory_space<vmem>>, %arg5: memref<1x16x256xf32, #tpu.memory_space<vmem>>) attributes {dimension_semantics = [#tpu.dimension_semantics<parallel>, #tpu.dimension_semantics<parallel>], iteration_bounds = array<i64: 2, 1>, scalar_prefetch = 0 : i64, scratch_operands = 0 : i64, tpu.core_type = #tpu.core_type<tc>, window_params = [{transform_indices = @transform_0, window_bounds = array<i64: 1, 72, 256>}, {pipeline_mode = #tpu.pipeline_mode<synchronous>, transform_indices = @transform_1, window_bounds = array<i64: 16, 72>}, {pipeline_mode = #tpu.pipeline_mode<synchronous>, transform_indices = @transform_2, window_bounds = array<i64: 16, 1>}, {transform_indices = @transform_3, window_bounds = array<i64: 1, 16, 256>}]} {
    %c0 = arith.constant 0 : index
    %c0_0 = arith.constant 0 : index
    %0 = vector.load %arg3[%c0, %c0_0] : memref<16x72xbf16, #tpu.memory_space<vmem>>, vector<16x72xbf16>
    %c0_1 = arith.constant 0 : index
    %c0_2 = arith.constant 0 : index
    %c0_3 = arith.constant 0 : index
    %1 = vector.load %arg2[%c0_1, %c0_2, %c0_3] : memref<1x72x256xbf16, #tpu.memory_space<vmem>>, vector<1x72x256xbf16>
    %2 = vector.shape_cast %1 : vector<1x72x256xbf16> to vector<72x256xbf16>
    %cst = arith.constant dense<0.000000e+00> : vector<16x256xf32>
    %3 = tpu.matmul %0, %2, %cst {dimension_numbers = #tpu.dot_dimension_numbers<[1], [0], [0], [1], [0, 0, 1, 1], [], []>} : vector<16x72xbf16>, vector<72x256xbf16>, vector<16x256xf32> -> vector<16x256xf32>
    %c0_4 = arith.constant 0 : index
    %c0_5 = arith.constant 0 : index
    %4 = vector.load %arg4[%c0_4, %c0_5] : memref<16x1xf32, #tpu.memory_space<vmem>>, vector<16x1xf32>
    %5 = vector.broadcast %4 : vector<16x1xf32> to vector<16x256xf32>
    %6 = arith.addf %3, %5 : vector<16x256xf32>
    %cst_6 = arith.constant 0.000000e+00 : f32
    %7 = vector.broadcast %cst_6 : f32 to vector<16x256xf32>
    %8 = arith.maximumf %6, %7 : vector<16x256xf32>
    %c0_7 = arith.constant 0 : index
    %c0_8 = arith.constant 0 : index
    %c0_9 = arith.constant 0 : index
    %9 = vector.load %arg5[%c0_7, %c0_8, %c0_9] : memref<1x16x256xf32, #tpu.memory_space<vmem>>, vector<1x16x256xf32>
    %10 = vector.shape_cast %9 : vector<1x16x256xf32> to vector<16x256xf32>
    %11 = vector.shape_cast %8 : vector<16x256xf32> to vector<1x16x256xf32>
    tpu.vector_store %arg5[%c0_7, %c0_8, %c0_9], %11 {strides = array<i32>} : memref<1x16x256xf32, #tpu.memory_space<vmem>>, vector<1x16x256xf32>,
    return
  }
  func.func @transform_0(%arg0: i32, %arg1: i32) -> (i32, i32, i32) {
    %c0_i32 = arith.constant 0 : i32
    %c0_i32_0 = arith.constant 0 : i32
    return %arg0, %c0_i32, %arg1 : i32, i32, i32
  }
  func.func @transform_1(%arg0: i32, %arg1: i32) -> (i32, i32) {
    %c0_i32 = arith.constant 0 : i32
    %c0_i32_0 = arith.constant 0 : i32
    %c0_i32_1 = arith.constant 0 : i32
    return %c0_i32, %c0_i32_0 : i32, i32
  }
  func.func @transform_2(%arg0: i32, %arg1: i32) -> (i32, i32) {
    %c0_i32 = arith.constant 0 : i32
    %c0_i32_0 = arith.constant 0 : i32
    %c0_i32_1 = arith.constant 0 : i32
    return %c0_i32, %c0_i32_0 : i32, i32
  }
  func.func @transform_3(%arg0: i32, %arg1: i32) -> (i32, i32, i32) {
    %c0_i32 = arith.constant 0 : i32
    %c0_i32_0 = arith.constant 0 : i32
    return %arg0, %c0_i32, %arg1 : i32, i32, i32
  }
}

</mosaic_0001>

<llo_original>
// kernel: tpu_custom_call.1
$region0: #{tpu_custom_call.1}
  #allocation0 [shape = 'u32[]', space=smem, size = 0x4, offset = 0x4, fixed_abs, tag = 'smem constant byte address 0x4 - core index']
  #allocation1 [shape = 'u32[144,128]{1,0:T(1,128)}', space=vmem, size = 0x12000, scoped, tag = 'internal scratch']
  %s0 = inlined_call_operand.hbm [shape: bf16[2,72,256], index: 0, kind: input, shape index: {}]
  %s1 = inlined_call_operand.vmem [shape: bf16[16,72], index: 1, kind: input, shape index: {}]
  %s2 = inlined_call_operand.vmem [shape: f32[16,1], index: 2, kind: input, shape index: {}]
  %s3 = inlined_call_operand.hbm [shape: f32[2,16,256], index: 3, kind: output, shape index: {}]
  %s4 = sld [smem:[#allocation0]]
  $region49: #{tpu_custom_call.1} parent=0
    _
  %s6 = ssub.s32 1, %s4
  %s7 = scalar_select 0, %s6, %s4
  $region1: #{tpu_custom_call.1} parent=0
    #allocation2 [shape = 'u8[73728]{0}', space=vmem, size = 0x12000, scoped, tag = 'input window, operand 0']
    #allocation3 [shape = 's32[2]{0}', space=sflag, size = 0x8, scoped, tag = 'scoped memory for tpu_custom_call.1']
    #allocation4 [shape = 's32[2]{0}', space=sflag, size = 0x8, scoped, tag = 'scoped memory for tpu_custom_call.1']
    #allocation5 [shape = 'u8[32768]{0}', space=vmem, size = 0x8000, scoped, tag = 'output window, operand 0']
    %8 = vsyncpa [#allocation3], 0
    %s9 = scalar_lea.sflag [#allocation3], 1
    %10 = vsyncpa %s9, 0
    %11 = vsyncpa [#allocation4], 0
    %s12 = scalar_lea.sflag [#allocation4], 1
    %13 = vsyncpa %s12, 0
    loop: start=0, step=1, limit=4
    $region2: #{tpu_custom_call.1} parent=1 // loop_pre_header
      _
    $region3: #{tpu_custom_call.1} parent=1 // loop_header
      %s15 = sphi 0, %s19
      %p16 = scmp.ge.s32.totalorder %s15, 4
      %s22 = sphi 0, %s34
      %s23 = sphi 0, %s30
      %s24 = sphi 0, %s22
      %s25 = sphi 0, %s23
      %s26 = sphi 0, %s24
      %s27 = sphi 0, %s25
      %s39 = sphi 0, %s41
      %s42 = sphi 0, %s39
      %s43 = sphi 0, %s42
      %s59 = sphi 0, %s43
      %s63 = sphi 0, %s63
      %s65 = sphi 0, %s63
      %s66 = sphi 0, %s65
      %s80 = sphi 0, %s66
      %s84 = sphi 0, %s84
      %s86 = sphi 0, %s84
      %s87 = sphi 0, %s86
      %s101 = sphi 0, %s87
      %s109 = sphi 0, %s111
      %s112 = sphi 0, %s109
      %s113 = sphi 0, %s112
      %s129 = sphi 0, %s113
    $region4: #{tpu_custom_call.1} parent=1 // loop_header_branch
      %18 = sbr.rel (%p16) target = $region8
    $region5: #{tpu_custom_call.1} parent=1 // loop_body
      %s20 = ssub.s32 %s15, 1
      %s21 = ssub.s32 %s15, 2
      %s28 = sadd.s32 1, %s23
      %p29 = scmp.ge.s32.totalorder %s28, 1
      %s30 = scalar_select %p29, 0, %s28
      %s31 = sadd.s32 1, %s22
      %s32 = scalar_select %p29, %s31, %s22
      %p33 = scmp.ge.s32.totalorder %s32, 2
      %s34 = scalar_select %p33, 0, %s32
      %s35 = ssub.s32 %s22, %s34
      %s36 = ssub.s32 %s23, %s30
      %s37 = sor.u32 %s35, %s36
      %p38 = scmp.eq.s32.totalorder %s37, 0
      %s40 = sadd.s32 %s39, 1
      %s41 = scalar_select %p38, %s39, %s40
      %p44 = pneg %p38
      %p45 = scmp.eq.s32.totalorder %s15, 1
      %p46 = por %p44, %p45
      %p47 = scmp.ne.s32.totalorder %s39, %s42
      %p48 = scmp.eq.s32.totalorder %s15, 0
      %p49 = por %p47, %p48
      %p50 = scmp.ne.s32.totalorder %s39, %s42
      %p51 = scmp.eq.s32.totalorder %s20, 1
      %p52 = por %p50, %p51
      %p53 = scmp.ne.s32.totalorder %s42, %s43
      %p54 = scmp.eq.s32.totalorder %s20, 0
      %p55 = por %p53, %p54
      %p56 = scmp.ne.s32.totalorder %s42, %s43
      %p57 = scmp.eq.s32.totalorder %s21, 1
      %p58 = por %p56, %p57
      %p60 = scmp.ne.s32.totalorder %s43, %s59
      %p61 = scmp.eq.s32.totalorder %s21, 0
      %p62 = por %p60, %p61
      %s64 = sadd.s32 %s63, 1
      %p67 = scmp.eq.s32.totalorder %s15, 1
      %p68 = scmp.ne.s32.totalorder %s63, %s65
      %p69 = scmp.eq.s32.totalorder %s15, 0
      %p70 = por %p68, %p69
      %p71 = scmp.ne.s32.totalorder %s63, %s65
      %p72 = scmp.eq.s32.totalorder %s20, 1
      %p73 = por %p71, %p72
      %p74 = scmp.ne.s32.totalorder %s65, %s66
      %p75 = scmp.eq.s32.totalorder %s20, 0
      %p76 = por %p74, %p75
      %p77 = scmp.ne.s32.totalorder %s65, %s66
      %p78 = scmp.eq.s32.totalorder %s21, 1
      %p79 = por %p77, %p78
      %p81 = scmp.ne.s32.totalorder %s66, %s80
      %p82 = scmp.eq.s32.totalorder %s21, 0
      %p83 = por %p81, %p82
      %s85 = sadd.s32 %s84, 1
      %p88 = scmp.eq.s32.totalorder %s15, 1
      %p89 = scmp.ne.s32.totalorder %s84, %s86
      %p90 = scmp.eq.s32.totalorder %s15, 0
      %p91 = por %p89, %p90
      %p92 = scmp.ne.s32.totalorder %s84, %s86
      %p93 = scmp.eq.s32.totalorder %s20, 1
      %p94 = por %p92, %p93
      %p95 = scmp.ne.s32.totalorder %s86, %s87
      %p96 = scmp.eq.s32.totalorder %s20, 0
      %p97 = por %p95, %p96
      %p98 = scmp.ne.s32.totalorder %s86, %s87
      %p99 = scmp.eq.s32.totalorder %s21, 1
      %p100 = por %p98, %p99
      %p102 = scmp.ne.s32.totalorder %s87, %s101
      %p103 = scmp.eq.s32.totalorder %s21, 0
      %p104 = por %p102, %p103
      %s105 = ssub.s32 %s22, %s34
      %s106 = ssub.s32 %s23, %s30
      %s107 = sor.u32 %s105, %s106
      %p108 = scmp.eq.s32.totalorder %s107, 0
      %s110 = sadd.s32 %s109, 1
      %s111 = scalar_select %p108, %s109, %s110
      %p114 = pneg %p108
      %p115 = scmp.eq.s32.totalorder %s15, 1
      %p116 = por %p114, %p115
      %p117 = scmp.ne.s32.totalorder %s109, %s112
      %p118 = scmp.eq.s32.totalorder %s15, 0
      %p119 = por %p117, %p118
      %p120 = scmp.ne.s32.totalorder %s109, %s112
      %p121 = scmp.eq.s32.totalorder %s20, 1
      %p122 = por %p120, %p121
      %p123 = scmp.ne.s32.totalorder %s112, %s113
      %p124 = scmp.eq.s32.totalorder %s20, 0
      %p125 = por %p123, %p124
      %p126 = scmp.ne.s32.totalorder %s112, %s113
      %p127 = scmp.eq.s32.totalorder %s21, 1
      %p128 = por %p126, %p127
      %p130 = scmp.ne.s32.totalorder %s113, %s129
      %p131 = scmp.eq.s32.totalorder %s21, 0
      %p132 = por %p130, %p131
      %p133 = scmp.le.s32.totalorder 1, %s15
      %p134 = scmp.lt.s32.totalorder %s15, 3
      %p135 = pnand %p133, %p134
      %p136 = pneg %p135
      // Predicated region
      $region9: #{tpu_custom_call.1} parent=5 // pred_check
        _
      $region10: #{tpu_custom_call.1} parent=5 // pred_check_branch
        %138 = sbr.rel (%p135) target = $region12
      $region11: #{tpu_custom_call.1} parent=5 // pred_region
        %s139 = ssub.s32 %s15, 1
        // Predicated region
        $region13: #{tpu_custom_call.1} parent=11 // pred_check
          %p140 = pneg %p76
        $region14: #{tpu_custom_call.1} parent=11 // pred_check_branch
          %142 = sbr.rel (%p140) target = $region16
        $region15: #{tpu_custom_call.1} parent=11 // pred_region
          _
        $region16: #{tpu_custom_call.1} parent=11 // pred_fallthru
          _
        // Predicated region
        $region17: #{tpu_custom_call.1} parent=11 // pred_check
          %p143 = pneg %p97
        $region18: #{tpu_custom_call.1} parent=11 // pred_check_branch
          %145 = sbr.rel (%p143) target = $region20
        $region19: #{tpu_custom_call.1} parent=11 // pred_region
          _
        $region20: #{tpu_custom_call.1} parent=11 // pred_fallthru
          _
      $region12: #{tpu_custom_call.1} parent=5 // pred_fallthru
        _
      %p146 = scmp.lt.s32.totalorder %s15, 2
      // Predicated region
      $region21: #{tpu_custom_call.1} parent=5 // pred_check
        %p147 = pneg %p146
      $region22: #{tpu_custom_call.1} parent=5 // pred_check_branch
        %149 = sbr.rel (%p147) target = $region24
      $region23: #{tpu_custom_call.1} parent=5 // pred_region
        // Predicated region
        $region25: #{tpu_custom_call.1} parent=23 // pred_check
          %p150 = pneg %p49
        $region26: #{tpu_custom_call.1} parent=23 // pred_check_branch
          %152 = sbr.rel (%p150) target = $region28
        $region27: #{tpu_custom_call.1} parent=23 // pred_region
          %s153 = sand.u32 %s39, 1
          %s154 = scalar_lea.sflag [#allocation3], %s153
          %s155 = sand.u32 %s39, 1
          %s156 = smul.addr %s155, 72
          %s157 = scalar_lea.vmem [#allocation2], %s156
          %s158 = smul.u32 2, %s23
          %s160 = ssub.s32 1152, 1152
          %161 = vsyncadd %s154, %s160
          %s162 = smul.addr %s22, 18
          %s163 = sadd.s32 %s158, %s162
          %s164 = smul.addr %s163, 64
          %s165 = scalar_lea.hbm %s0, %s164
          %s166 = sshll.u32 %s157, 4
          %s167 = int_to_ptr.vmem [resolvable:$true] %s166
          %172 = dma.hbm_to_vmem [thread:$0]  %s165, 1152, %s167, %s154, 128, 128, 8
        $region28: #{tpu_custom_call.1} parent=23 // pred_fallthru
          _
      $region24: #{tpu_custom_call.1} parent=5 // pred_fallthru
        _
      %p173 = scmp.le.s32.totalorder 1, %s15
      %p174 = scmp.lt.s32.totalorder %s15, 3
      %p175 = pnand %p173, %p174
      %p176 = pneg %p175
      // Predicated region
      $region29: #{tpu_custom_call.1} parent=5 // pred_check
        _
      $region30: #{tpu_custom_call.1} parent=5 // pred_check_branch
        %178 = sbr.rel (%p175) target = $region32
      $region31: #{tpu_custom_call.1} parent=5 // pred_region
        %s179 = ssub.s32 %s15, 1
        %s180 = sand.u32 %s42, 1
        %s181 = scalar_lea.sflag [#allocation3], %s180
        %s182 = sand.u32 %s42, 1
        %s183 = smul.addr %s182, 72
        %s184 = scalar_lea.vmem [#allocation2], %s183
        // Predicated region
        $region33: #{tpu_custom_call.1} parent=31 // pred_check
          %p185 = pneg %p55
        $region34: #{tpu_custom_call.1} parent=31 // pred_check_branch
          %187 = sbr.rel (%p185) target = $region36
        $region35: #{tpu_custom_call.1} parent=31 // pred_region
          %188 = dma.done %s181, 1152
        $region36: #{tpu_custom_call.1} parent=31 // pred_fallthru
          _
        %s189 = sand.u32 %s42, 1
        %s190 = scalar_lea.sflag [#allocation3], %s189
        %s191 = sand.u32 %s42, 1
        %s192 = smul.addr %s191, 72
        %s193 = scalar_lea.vmem [#allocation2], %s192
        %p194 = pneg %p55
        %p195 = pneg %p52
        %p196 = pneg %p76
        %p197 = pneg %p73
        %p198 = pneg %p97
        %p199 = pneg %p94
        %p200 = pneg %p125
        %p201 = pneg %p122
        %s202 = sand.u32 %s112, 1
        %s203 = scalar_lea.sflag [#allocation4], %s202
        %s204 = sand.u32 %s112, 1
        %s205 = smul.addr %s204, 32
        %s206 = scalar_lea.vmem [#allocation5], %s205
        %s207 = smul.u32 2, %s25
        %s208 = smul.u32 2, %s25
        %v210 = vld [vmem:[%s1] sm:$0xf]
        %v211 = vld [vmem:[%s1 + $0x4] sm:$0xf]
        %v212 = vld [vmem:[%s184] sm:$0xff]
        %v213 = vld [vmem:[%s184 + $0x8] sm:$0xff]
        %v214 = vld [vmem:[%s184 + $0x10] sm:$0xff]
        %v215 = vld [vmem:[%s184 + $0x18] sm:$0xff]
        %v216 = vld [vmem:[%s184 + $0x20] sm:$0xff]
        %v217 = vld [vmem:[%s184 + $0x28] sm:$0xff]
        %v218 = vld [vmem:[%s184 + $0x30] sm:$0xff]
        %v219 = vld [vmem:[%s184 + $0x38] sm:$0xff]
        %v220 = vld [vmem:[%s184 + $0x40] sm:$0xff]
        %v221 = vld [vmem:[%s2] sm:$0xff]
        %v222 = vld [vmem:[%s2 + $0x8] sm:$0xff]
        %224 = vset.pattern.permute.xlu0 0
        %225 = vperm.xlu0 %224, %v221
        %v226 = vpop.permute.xlu0 %225
        %229 = vset.pattern.permute.xlu0 0
        %230 = vperm.xlu0 %229, %v222
        %v231 = vpop.permute.xlu0 %230
        %v235 = vunpack.c.l.b16 %v210
        %v236 = vunpack.c.l.b16 %v211
        %v237 = vpack.c.b16 %v236, %v235
        %v247 = vunpack.c.l.b16 %v212
        %v248 = vunpack.c.h.b16 %v212
        %v249 = vunpack.c.l.b16 %v213
        %v250 = vunpack.c.h.b16 %v213
        %v251 = vunpack.c.l.b16 %v214
        %v252 = vunpack.c.h.b16 %v214
        %v253 = vunpack.c.l.b16 %v215
        %v254 = vunpack.c.h.b16 %v215
        %v255 = vunpack.c.l.b16 %v216
        %v256 = vunpack.c.h.b16 %v216
        %v257 = vunpack.c.l.b16 %v217
        %v258 = vunpack.c.h.b16 %v217
        %v259 = vunpack.c.l.b16 %v218
        %v260 = vunpack.c.h.b16 %v218
        %v261 = vunpack.c.l.b16 %v219
        %v262 = vunpack.c.h.b16 %v219
        %v263 = vunpack.c.l.b16 %v220
        %v264 = vunpack.c.h.b16 %v220
        %v265 = vpack.c.b16 %v249, %v247
        %v266 = vpack.c.b16 %v250, %v248
        %v267 = vpack.c.b16 %v253, %v251
        %v268 = vpack.c.b16 %v254, %v252
        %v269 = vpack.c.b16 %v257, %v255
        %v270 = vpack.c.b16 %v258, %v256
        %v271 = vpack.c.b16 %v261, %v259
        %v272 = vpack.c.b16 %v262, %v260
        %v273 = vpack.c.b16 %v263, %v263
        %v274 = vpack.c.b16 %v264, %v264
        %vm283 = vcmask 588800
        %v285 = vsel %vm283, %v237, 0
        %vm287 = vcmask 1043456
        %v289 = vsel %vm287, %v273, 0
        %v292 = vsel %vm287, %v274, 0
        %294 = vmatprep.subr.bf16.mxu0 %v266
        %295 = vmatpush1.bf16.msra.mxu0 %v265
        %296 = vmatprep.subr.bf16.mxu0 %v268
        %297 = vmatpush1.bf16.msra.mxu0 %v267
        %298 = vmatprep.subr.bf16.mxu0 %v270
        %299 = vmatpush1.bf16.msra.mxu0 %v269
        %300 = vmatprep.subr.bf16.mxu0 %v272
        %301 = vmatpush1.bf16.msra.mxu0 %v271
        %302 = vmatprep.subr.bf16.mxu0 %v292
        %303 = vmatpush1.bf16.msra.mxu0 %v289
        %304 = vmatprep.subr.bf16.mxu0 0
        %305 = vmatpush1.bf16.msra.mxu0 0
        %306 = vmatprep.subr.bf16.mxu0 0
        %307 = vmatpush1.bf16.msra.mxu0 0
        %308 = vmatprep.subr.bf16.mxu0 0
        %309 = vmatpush1.bf16.msra.mxu0 0
        %310 = vmatprep.subr.bf16.mxu0 0
        %311 = vmatpush1.bf16.msra.mxu0 0
        %312 = vmatprep.subr.bf16.mxu0 0
        %313 = vmatpush1.bf16.msra.mxu0 0
        %314 = vmatprep.subr.bf16.mxu0 0
        %315 = vmatpush1.bf16.msra.mxu0 0
        %316 = vmatprep.subr.bf16.mxu0 0
        %317 = vmatpush1.bf16.msra.mxu0 0
        %318 = vmatprep.subr.bf16.mxu0 0
        %319 = vmatpush1.bf16.msra.mxu0 0
        %320 = vmatprep.subr.bf16.mxu0 0
        %321 = vmatpush1.bf16.msra.mxu0 0
        %322 = vmatprep.subr.bf16.mxu0 0
        %323 = vmatpush1.bf16.msra.mxu0 0
        %324 = vmatprep.subr.bf16.mxu0 0
        %325 = vmatpush1.bf16.msra.mxu0 0
        %326 = vmatprep.mubr.bf16.mxu0 0
        %327 = vmatmul.mubr.bf16.gmra.mrb[0].mxu0 %v285
        %v328 = vpop.f32.mrb[0].mxu0
        %v329 = vadd.f32 %v226, %v328
        %v330 = vpop.f32.mrb[0].mxu0
        %v331 = vadd.f32 %v226, %v330
        %v332 = vpop.f32.mrb[0].mxu0
        %v333 = vadd.f32 %v231, %v332
        %v334 = vpop.f32.mrb[0].mxu0
        %v335 = vadd.f32 %v231, %v334
        %336 = vdwg.mxu0
        %v337 = vmax.f32 %v329, 0.0
        %v338 = vmax.f32 %v331, 0.0
        %v339 = vmax.f32 %v333, 0.0
        %v340 = vmax.f32 %v335, 0.0
        %341 = vst [vmem:[%s206] sm:$0xff] %v337
        %342 = vst [vmem:[%s206 + $0x8] sm:$0xff] %v338
        %343 = vst [vmem:[%s206 + $0x10] sm:$0xff] %v339
        %344 = vst [vmem:[%s206 + $0x18] sm:$0xff] %v340
        %s345 = sand.u32 %s112, 1
        %s346 = scalar_lea.sflag [#allocation4], %s345
        %s347 = sand.u32 %s112, 1
        %s348 = smul.addr %s347, 32
        %s349 = scalar_lea.vmem [#allocation5], %s348
        // Predicated region
        $region37: #{tpu_custom_call.1} parent=31 // pred_check
          %p350 = pneg %p122
        $region38: #{tpu_custom_call.1} parent=31 // pred_check_branch
          %352 = sbr.rel (%p350) target = $region40
        $region39: #{tpu_custom_call.1} parent=31 // pred_region
          %s353 = smul.u32 2, %s25
          %s355 = ssub.s32 512, 512
          %356 = vsyncadd %s346, %s355
          %s357 = smul.addr %s24, 4
          %s358 = sadd.s32 %s353, %s357
          %s359 = smul.addr %s358, 128
          %s360 = scalar_lea.hbm %s3, %s359
          %s361 = sshll.u32 %s349, 4
          %s362 = int_to_ptr.vmem [resolvable:$true] %s361
          %367 = dma.vmem_to_hbm [thread:$0]  %s362, 512, %s360, %s346, 256, 256, 16
        $region40: #{tpu_custom_call.1} parent=31 // pred_fallthru
          _
      $region32: #{tpu_custom_call.1} parent=5 // pred_fallthru
        _
      %p368 = scmp.le.s32.totalorder 2, %s15
      // Predicated region
      $region41: #{tpu_custom_call.1} parent=5 // pred_check
        %p369 = pneg %p368
      $region42: #{tpu_custom_call.1} parent=5 // pred_check_branch
        %371 = sbr.rel (%p369) target = $region44
      $region43: #{tpu_custom_call.1} parent=5 // pred_region
        %s372 = ssub.s32 %s15, 2
        // Predicated region
        $region45: #{tpu_custom_call.1} parent=43 // pred_check
          %p373 = pneg %p128
        $region46: #{tpu_custom_call.1} parent=43 // pred_check_branch
          %375 = sbr.rel (%p373) target = $region48
        $region47: #{tpu_custom_call.1} parent=43 // pred_region
          %s376 = sand.u32 %s113, 1
          %s377 = scalar_lea.sflag [#allocation4], %s376
          %s378 = sand.u32 %s113, 1
          %s379 = smul.addr %s378, 32
          %s380 = scalar_lea.vmem [#allocation5], %s379
          %381 = dma.done %s377, 512
        $region48: #{tpu_custom_call.1} parent=43 // pred_fallthru
          _
      $region44: #{tpu_custom_call.1} parent=5 // pred_fallthru
        _
    $region6: #{tpu_custom_call.1} parent=1 // loop_footer
      %s19 = sadd.s32 1, %s15
    $region7: #{tpu_custom_call.1} parent=1 // loop_footer_branch
      %14 = sbr.rel target = $region3
    $region8: #{tpu_custom_call.1} parent=1 // loop_exit
      _
    %382 = vsyncpa [#allocation3], 1
    %s383 = scalar_lea.sflag [#allocation3], 1
    %384 = vsyncpa %s383, 1
    %385 = vsyncpa [#allocation4], 1
    %s386 = scalar_lea.sflag [#allocation4], 1
    %387 = vsyncpa %s386, 1

</llo_original>
